<compile_context>
chip_gen: v6e
topology: v6e:2x2x1
jax: 0.10.0
libtpu: 0.0.40
codegen_flags: <defaults>
</compile_context>

<pallas_src>
import functools

import jax
import jax.numpy as jnp
from jax.experimental import pallas as pl
from jax.experimental.pallas import tpu as pltpu


def mlcnn_kernel(patches_ref, wconv_ref, wfc_ref, bfc_ref, out_ref, acc_ref,
                 *, inv_hw):
    m = pl.program_id(1)

    @pl.when(m == 0)
    def _():
        acc_ref[...] = jnp.zeros_like(acc_ref)

    # Conv-as-matmul on this row tile (bias folded in via the ones column):
    # bf16 operands, f32 accumulation on the MXU.
    conv = jnp.dot(patches_ref[0], wconv_ref[...],
                   preferred_element_type=jnp.float32)          # [TILE_M, 512]
    conv = jnp.maximum(conv, 0.0)                               # ReLU (VPU)

    # Global-average-pool partial sums kept per-sublane ([8, 512]): pure vreg
    # adds per tile; the cross-sublane XLU reduce is deferred to finalize.
    tile_m, feat = conv.shape
    acc_ref[...] += conv.reshape(tile_m // 8, 8, feat).sum(axis=0)

    @pl.when(m == pl.num_programs(1) - 1)
    def _():
        pooled = jnp.sum(acc_ref[...], axis=0, keepdims=True) * inv_hw  # [1, 512]
        pooled = pooled.astype(jnp.bfloat16)
        logits = jnp.dot(pooled, wfc_ref[...],
                         preferred_element_type=jnp.float32) + bfc_ref[...]
        out_ref[...] = logits[None].astype(out_ref.dtype)       # [1, 1, N_pad]


def im2col_3x3(x_nhwc):
    """3x3, stride 1, pad 1 patches.  Returns [B, H*W, 9*C]."""
    B, H, W, C = x_nhwc.shape
    xp = jnp.pad(x_nhwc, ((0, 0), (1, 1), (1, 1), (0, 0)))
    cols = [xp[:, dy:dy + H, dx:dx + W, :] for dy in range(3) for dx in range(3)]
    patches = jnp.concatenate(cols, axis=-1)                    # [B, H, W, 9*C]
    return patches.reshape(B, H * W, 9 * C)


def _round_up(x, m):
    return ((x + m - 1) // m) * m


def _pick_tile_m(hw, k_eff, feat, vmem_budget_bytes=24 * 1024 * 1024):
    """Largest useful row tile that fits a double-buffered VMEM budget."""
    k_lanes = _round_up(k_eff, 128)
    # 2 buffers of a bf16 (lane-padded) patch row + f32 conv/pool temporaries.
    bytes_per_row = 2 * (2 * k_lanes) + 2 * (4 * feat)
    fitting = [t for t in (128, 256, 512, 1024, 2048)
               if t * bytes_per_row <= vmem_budget_bytes] or [128]
    covering = [t for t in fitting if t >= hw]
    # Whole feature map in one tile when possible, else the largest fitting tile.
    return covering[0] if covering else fitting[-1]


def mlcnnet_forward(x_nchw, params):
    """Forward pass of MLCNNet.  x_nchw: [B, C, H, W] float32."""
    w_conv, b_conv, w_fc, b_fc = params
    B, C, H, W = x_nchw.shape
    HW = H * W
    feat = w_conv.shape[1]                 # 512
    n_classes = w_fc.shape[1]

    K_eff = 9 * C + 1                      # 9*C patch cols + ones column (bias)
    N_pad = _round_up(n_classes, 128)      # lane-dense output slab

    TILE_M = _pick_tile_m(HW, K_eff, feat)
    HW_pad = _round_up(HW, TILE_M)
    m_steps = HW_pad // TILE_M

    # im2col + ones column (bias fold); zero-pad rows to a tile multiple (zero
    # rows contribute relu(0) = 0 to the pool sum, which divides by true HW).
    x_nhwc = jnp.transpose(x_nchw, (0, 2, 3, 1))
    patches = im2col_3x3(x_nhwc)                                # [B, HW, 9C]
    patches = jnp.concatenate(
        [patches, jnp.ones((B, HW, 1), patches.dtype)], axis=-1)  # [B, HW, K_eff]
    if HW_pad != HW:
        patches = jnp.pad(patches, ((0, 0), (0, HW_pad - HW), (0, 0)))
    patches = patches.astype(jnp.bfloat16)

    # Conv weight with the bias as its last K row (matches the ones column).
    w_conv_eff = jnp.concatenate([w_conv, b_conv[None, :]], axis=0)
    w_conv_eff = w_conv_eff.astype(jnp.bfloat16)                # [K_eff, 512]

    w_fc_p = jnp.pad(w_fc, ((0, 0), (0, N_pad - n_classes))).astype(jnp.bfloat16)
    b_fc2d = jnp.pad(b_fc, ((0, N_pad - n_classes),)).reshape(1, N_pad)
    b_fc2d = b_fc2d.astype(jnp.float32)

    kernel = functools.partial(mlcnn_kernel, inv_hw=1.0 / HW)

    out_padded = pl.pallas_call(
        kernel,
        out_shape=jax.ShapeDtypeStruct((B, 1, N_pad), jnp.float32),
        grid_spec=pltpu.PrefetchScalarGridSpec(
            num_scalar_prefetch=0,
            grid=(B, m_steps),
            in_specs=[
                pl.BlockSpec((1, TILE_M, K_eff), lambda b, m: (b, m, 0)),
                pl.BlockSpec((K_eff, feat), lambda b, m: (0, 0)),
                pl.BlockSpec((feat, N_pad), lambda b, m: (0, 0)),
                pl.BlockSpec((1, N_pad), lambda b, m: (0, 0)),
            ],
            out_specs=pl.BlockSpec((1, 1, N_pad), lambda b, m: (b, 0, 0)),
            scratch_shapes=[pltpu.VMEM((8, feat), jnp.float32)],
        ),
        compiler_params=pltpu.CompilerParams(
            dimension_semantics=("parallel", "arbitrary"),
            vmem_limit_bytes=32 * 1024 * 1024,
        ),
    )(patches, w_conv_eff, w_fc_p, b_fc2d)

    return out_padded[:, 0, :n_classes]


def reference_forward(x_nchw, params):
    """Pure-JAX f32 reference with identical semantics."""
    w_conv, b_conv, w_fc, b_fc = params
    x_nhwc = jnp.transpose(x_nchw, (0, 2, 3, 1))
    patches = im2col_3x3(x_nhwc)                                # [B, HW, 9C]
    conv = jnp.maximum(patches @ w_conv + b_conv[None, None, :], 0.0)
    pooled = conv.mean(axis=1)                                  # [B, 512]
    return pooled @ w_fc + b_fc[None, :]


def init_params(key, c_in, n_classes, feat_dim=512):
    k1, k2, k3, k4 = jax.random.split(key, 4)
    kdim = 9 * c_in
    # conv weight stored as [KH*KW*C_in, feat_dim] (matches im2col ordering)
    w_conv = jax.random.normal(k1, (kdim, feat_dim), jnp.float32) * (1.0 / kdim) ** 0.5
    b_conv = jax.random.normal(k2, (feat_dim,), jnp.float32) * 0.01
    # classifier weight stored as [512, n_classes]  (y = x @ W^T + b in torch)
    w_fc = jax.random.normal(k3, (feat_dim, n_classes), jnp.float32) * (1.0 / feat_dim) ** 0.5
    b_fc = jax.random.normal(k4, (n_classes,), jnp.float32) * 0.01
    return w_conv, b_conv, w_fc, b_fc


if __name__ == "__main__":
    key = jax.random.PRNGKey(0)
    k_x, k_p = jax.random.split(key)

    B, C, H, W = 2, 4, 16, 16
    n_classes = 10

    x = jax.random.normal(k_x, (B, C, H, W), jnp.float32)
    params = init_params(k_p, C, n_classes)

    forward = jax.jit(mlcnnet_forward)
    out = jax.block_until_ready(forward(x, params))

    ref = reference_forward(x, params)
    assert out.shape == (B, n_classes)
    # bf16 conv operands + bf16 FC weights (f32 accumulation) -> loose tolerance.
    assert jnp.allclose(out, ref, atol=2e-2, rtol=2e-2)

    print("KERNEL_OK")
</pallas_src>

<mosaic_0001>
module attributes {stable_mosaic.version = 11 : i64} {
  func.func @mlcnn_kernel(%arg0: i32, %arg1: i32, %arg2: memref<1x256x37xbf16, #tpu.memory_space<vmem>>, %arg3: memref<37x512xbf16, #tpu.memory_space<vmem>>, %arg4: memref<512x128xbf16, #tpu.memory_space<vmem>>, %arg5: memref<1x128xf32, #tpu.memory_space<vmem>>, %arg6: memref<1x1x128xf32, #tpu.memory_space<vmem>>, %arg7: memref<8x512xf32, #tpu.memory_space<vmem>>) attributes {dimension_semantics = [#tpu.dimension_semantics<parallel>, #tpu.dimension_semantics<arbitrary>], iteration_bounds = array<i64: 2, 1>, scalar_prefetch = 0 : i64, scratch_operands = 1 : i64, tpu.core_type = #tpu.core_type<tc>, window_params = [{transform_indices = @transform_0, window_bounds = array<i64: 1, 256, 37>}, {pipeline_mode = #tpu.pipeline_mode<synchronous>, transform_indices = @transform_1, window_bounds = array<i64: 37, 512>}, {pipeline_mode = #tpu.pipeline_mode<synchronous>, transform_indices = @transform_2, window_bounds = array<i64: 512, 128>}, {pipeline_mode = #tpu.pipeline_mode<synchronous>, transform_indices = @transform_3, window_bounds = array<i64: 1, 128>}, {transform_indices = @transform_4, window_bounds = array<i64: 1, 1, 128>}]} {
    %c0_i32 = arith.constant 0 : i32
    %0 = arith.cmpi eq, %arg1, %c0_i32 : i32
    %1 = arith.extui %0 : i1 to i32
    %c0_i32_0 = arith.constant 0 : i32
    %2 = arith.cmpi ne, %1, %c0_i32_0 : i32
    scf.if %2 {
      %cst_13 = arith.constant 0.000000e+00 : f32
      %17 = vector.broadcast %cst_13 : f32 to vector<8x512xf32>
      %c0_14 = arith.constant 0 : index
      %c0_15 = arith.constant 0 : index
      %18 = vector.load %arg7[%c0_14, %c0_15] : memref<8x512xf32, #tpu.memory_space<vmem>>, vector<8x512xf32>
      tpu.vector_store %arg7[%c0_14, %c0_15], %17 {strides = array<i32>} : memref<8x512xf32, #tpu.memory_space<vmem>>, vector<8x512xf32>,
    } else {
    }
    %c0 = arith.constant 0 : index
    %c0_1 = arith.constant 0 : index
    %c0_2 = arith.constant 0 : index
    %3 = vector.load %arg2[%c0, %c0_1, %c0_2] : memref<1x256x37xbf16, #tpu.memory_space<vmem>>, vector<1x256x37xbf16>
    %4 = vector.shape_cast %3 : vector<1x256x37xbf16> to vector<256x37xbf16>
    %c0_3 = arith.constant 0 : index
    %c0_4 = arith.constant 0 : index
    %5 = vector.load %arg3[%c0_3, %c0_4] : memref<37x512xbf16, #tpu.memory_space<vmem>>, vector<37x512xbf16>
    %cst = arith.constant dense<0.000000e+00> : vector<256x512xf32>
    %6 = tpu.matmul %4, %5, %cst {dimension_numbers = #tpu.dot_dimension_numbers<[1], [0], [0], [1], [0, 0, 1, 1], [], []>} : vector<256x37xbf16>, vector<37x512xbf16>, vector<256x512xf32> -> vector<256x512xf32>
    %cst_5 = arith.constant 0.000000e+00 : f32
    %7 = vector.broadcast %cst_5 : f32 to vector<256x512xf32>
    %8 = arith.maximumf %6, %7 : vector<256x512xf32>
    %c0_6 = arith.constant 0 : index
    %c0_7 = arith.constant 0 : index
    %9 = vector.load %arg7[%c0_6, %c0_7] : memref<8x512xf32, #tpu.memory_space<vmem>>, vector<8x512xf32>
    %10 = vector.shape_cast %8 : vector<256x512xf32> to vector<32x8x512xf32>
    %cst_8 = arith.constant dense<0.000000e+00> : vector<8x512xf32>
    %11 = vector.multi_reduction <add>, %10, %cst_8 [0] : vector<32x8x512xf32> to vector<8x512xf32>
    %12 = arith.addf %9, %11 : vector<8x512xf32>
    %c0_9 = arith.constant 0 : index
    %c0_10 = arith.constant 0 : index
    %13 = vector.load %arg7[%c0_9, %c0_10] : memref<8x512xf32, #tpu.memory_space<vmem>>, vector<8x512xf32>
    tpu.vector_store %arg7[%c0_9, %c0_10], %12 {strides = array<i32>} : memref<8x512xf32, #tpu.memory_space<vmem>>, vector<8x512xf32>,
    %c0_i32_11 = arith.constant 0 : i32
    %14 = arith.cmpi eq, %arg1, %c0_i32_11 : i32
    %15 = arith.extui %14 : i1 to i32
    %c0_i32_12 = arith.constant 0 : i32
    %16 = arith.cmpi ne, %15, %c0_i32_12 : i32
    scf.if %16 {
      %c0_13 = arith.constant 0 : index
      %c0_14 = arith.constant 0 : index
      %17 = vector.load %arg7[%c0_13, %c0_14] : memref<8x512xf32, #tpu.memory_space<vmem>>, vector<8x512xf32>
      %cst_15 = arith.constant dense<0.000000e+00> : vector<512xf32>
      %18 = vector.multi_reduction <add>, %17, %cst_15 [0] : vector<8x512xf32> to vector<512xf32>
      %19 = vector.shape_cast %18 : vector<512xf32> to vector<1x512xf32>
      %cst_16 = arith.constant 3.906250e-03 : f32
      %20 = vector.broadcast %cst_16 : f32 to vector<1x512xf32>
      %21 = arith.mulf %19, %20 : vector<1x512xf32>
      %22 = arith.truncf %21 : vector<1x512xf32> to vector<1x512xbf16>
      %c0_17 = arith.constant 0 : index
      %c0_18 = arith.constant 0 : index
      %23 = vector.load %arg4[%c0_17, %c0_18] : memref<512x128xbf16, #tpu.memory_space<vmem>>, vector<512x128xbf16>
      %cst_19 = arith.constant dense<0.000000e+00> : vector<1x128xf32>
      %24 = tpu.matmul %22, %23, %cst_19 {dimension_numbers = #tpu.dot_dimension_numbers<[1], [0], [0], [1], [0, 0, 1, 1], [], []>} : vector<1x512xbf16>, vector<512x128xbf16>, vector<1x128xf32> -> vector<1x128xf32>
      %c0_20 = arith.constant 0 : index
      %c0_21 = arith.constant 0 : index
      %25 = vector.load %arg5[%c0_20, %c0_21] : memref<1x128xf32, #tpu.memory_space<vmem>>, vector<1x128xf32>
      %26 = arith.addf %24, %25 : vector<1x128xf32>
      %27 = vector.shape_cast %26 : vector<1x128xf32> to vector<1x1x128xf32>
      %c0_22 = arith.constant 0 : index
      %c0_23 = arith.constant 0 : index
      %c0_24 = arith.constant 0 : index
      %28 = vector.load %arg6[%c0_22, %c0_23, %c0_24] : memref<1x1x128xf32, #tpu.memory_space<vmem>>, vector<1x1x128xf32>
      tpu.vector_store %arg6[%c0_22, %c0_23, %c0_24], %27 {strides = array<i32>} : memref<1x1x128xf32, #tpu.memory_space<vmem>>, vector<1x1x128xf32>,
    } else {
    }
    return
  }
  func.func @transform_0(%arg0: i32, %arg1: i32) -> (i32, i32, i32) {
    %c0_i32 = arith.constant 0 : i32
    %c0_i32_0 = arith.constant 0 : i32
    return %arg0, %arg1, %c0_i32 : i32, i32, i32
  }
  func.func @transform_1(%arg0: i32, %arg1: i32) -> (i32, i32) {
    %c0_i32 = arith.constant 0 : i32
    %c0_i32_0 = arith.constant 0 : i32
    %c0_i32_1 = arith.constant 0 : i32
    return %c0_i32, %c0_i32_0 : i32, i32
  }
  func.func @transform_2(%arg0: i32, %arg1: i32) -> (i32, i32) {
    %c0_i32 = arith.constant 0 : i32
    %c0_i32_0 = arith.constant 0 : i32
    %c0_i32_1 = arith.constant 0 : i32
    return %c0_i32, %c0_i32_0 : i32, i32
  }
  func.func @transform_3(%arg0: i32, %arg1: i32) -> (i32, i32) {
    %c0_i32 = arith.constant 0 : i32
    %c0_i32_0 = arith.constant 0 : i32
    %c0_i32_1 = arith.constant 0 : i32
    return %c0_i32, %c0_i32_0 : i32, i32
  }
  func.func @transform_4(%arg0: i32, %arg1: i32) -> (i32, i32, i32) {
    %c0_i32 = arith.constant 0 : i32
    %c0_i32_0 = arith.constant 0 : i32
    %c0_i32_1 = arith.constant 0 : i32
    return %arg0, %c0_i32, %c0_i32_0 : i32, i32, i32
  }
}

</mosaic_0001>

<llo_original>
// kernel: mlcnnet_forward.1
$region0: #{mlcnnet_forward.1}
  #allocation0 [shape = 'u32[]', space=smem, size = 0x4, offset = 0x4, fixed_abs, tag = 'smem constant byte address 0x4 - core index']
  #allocation1 [shape = 'u32[144,128]{1,0:T(1,128)}', space=vmem, size = 0x12000, scoped, tag = 'internal scratch']
  #allocation2 [shape = 'f32[8,512]{1,0:T(8,128)}', space=vmem, size = 0x4000, scoped, tag = 'scratch operand']
  %s0 = inlined_call_operand.vmem [shape: bf16[2,256,37], index: 0, kind: input, shape index: {}]
  %s1 = inlined_call_operand.vmem [shape: bf16[37,512], index: 1, kind: input, shape index: {}]
  %s2 = inlined_call_operand.vmem [shape: bf16[512,128], index: 2, kind: input, shape index: {}]
  %s3 = inlined_call_operand.vmem [shape: f32[1,128], index: 3, kind: input, shape index: {}]
  %s4 = inlined_call_operand.hbm [shape: f32[2,1,128], index: 4, kind: output, shape index: {}]
  %s5 = sld [smem:[#allocation0]]
  $region57: #{mlcnnet_forward.1} parent=0
    _
  %s7 = ssub.s32 1, %s5
  %s8 = scalar_select 0, %s7, %s5
  $region1: #{mlcnnet_forward.1} parent=0
    #allocation3 [shape = 'u8[1024]{0}', space=vmem, size = 0x400, scoped, tag = 'output window, operand 0']
    #allocation4 [shape = 's32[2]{0}', space=sflag, size = 0x8, scoped, tag = 'scoped memory for mlcnnet_forward.1']
    %9 = vsyncpa [#allocation4], 0
    %s10 = scalar_lea.sflag [#allocation4], 1
    %11 = vsyncpa %s10, 0
    loop: start=0, step=1, limit=4
    $region2: #{mlcnnet_forward.1} parent=1 // loop_pre_header
      _
    $region3: #{mlcnnet_forward.1} parent=1 // loop_header
      %s13 = sphi 0, %s17
      %p14 = scmp.ge.s32.totalorder %s13, 4
      %s20 = sphi 0, %s32
      %s21 = sphi 0, %s28
      %s22 = sphi 0, %s20
      %s23 = sphi 0, %s21
      %s24 = sphi 0, %s22
      %s25 = sphi 0, %s23
      %s37 = sphi 0, %s39
      %s40 = sphi 0, %s37
      %s41 = sphi 0, %s40
      %s57 = sphi 0, %s41
      %s61 = sphi 0, %s61
      %s63 = sphi 0, %s61
      %s64 = sphi 0, %s63
      %s78 = sphi 0, %s64
      %s82 = sphi 0, %s82
      %s84 = sphi 0, %s82
      %s85 = sphi 0, %s84
      %s99 = sphi 0, %s85
      %s103 = sphi 0, %s103
      %s105 = sphi 0, %s103
      %s106 = sphi 0, %s105
      %s120 = sphi 0, %s106
      %s126 = sphi 0, %s128
      %s129 = sphi 0, %s126
      %s130 = sphi 0, %s129
      %s146 = sphi 0, %s130
    $region4: #{mlcnnet_forward.1} parent=1 // loop_header_branch
      %16 = sbr.rel (%p14) target = $region8
    $region5: #{mlcnnet_forward.1} parent=1 // loop_body
      %s18 = ssub.s32 %s13, 1
      %s19 = ssub.s32 %s13, 2
      %s26 = sadd.s32 1, %s21
      %p27 = scmp.ge.s32.totalorder %s26, 1
      %s28 = scalar_select %p27, 0, %s26
      %s29 = sadd.s32 1, %s20
      %s30 = scalar_select %p27, %s29, %s20
      %p31 = scmp.ge.s32.totalorder %s30, 2
      %s32 = scalar_select %p31, 0, %s30
      %s33 = ssub.s32 %s20, %s32
      %s34 = ssub.s32 %s21, %s28
      %s35 = sor.u32 %s33, %s34
      %p36 = scmp.eq.s32.totalorder %s35, 0
      %s38 = sadd.s32 %s37, 1
      %s39 = scalar_select %p36, %s37, %s38
      %p42 = pneg %p36
      %p43 = scmp.eq.s32.totalorder %s13, 1
      %p44 = por %p42, %p43
      %p45 = scmp.ne.s32.totalorder %s37, %s40
      %p46 = scmp.eq.s32.totalorder %s13, 0
      %p47 = por %p45, %p46
      %p48 = scmp.ne.s32.totalorder %s37, %s40
      %p49 = scmp.eq.s32.totalorder %s18, 1
      %p50 = por %p48, %p49
      %p51 = scmp.ne.s32.totalorder %s40, %s41
      %p52 = scmp.eq.s32.totalorder %s18, 0
      %p53 = por %p51, %p52
      %p54 = scmp.ne.s32.totalorder %s40, %s41
      %p55 = scmp.eq.s32.totalorder %s19, 1
      %p56 = por %p54, %p55
      %p58 = scmp.ne.s32.totalorder %s41, %s57
      %p59 = scmp.eq.s32.totalorder %s19, 0
      %p60 = por %p58, %p59
      %s62 = sadd.s32 %s61, 1
      %p65 = scmp.eq.s32.totalorder %s13, 1
      %p66 = scmp.ne.s32.totalorder %s61, %s63
      %p67 = scmp.eq.s32.totalorder %s13, 0
      %p68 = por %p66, %p67
      %p69 = scmp.ne.s32.totalorder %s61, %s63
      %p70 = scmp.eq.s32.totalorder %s18, 1
      %p71 = por %p69, %p70
      %p72 = scmp.ne.s32.totalorder %s63, %s64
      %p73 = scmp.eq.s32.totalorder %s18, 0
      %p74 = por %p72, %p73
      %p75 = scmp.ne.s32.totalorder %s63, %s64
      %p76 = scmp.eq.s32.totalorder %s19, 1
      %p77 = por %p75, %p76
      %p79 = scmp.ne.s32.totalorder %s64, %s78
      %p80 = scmp.eq.s32.totalorder %s19, 0
      %p81 = por %p79, %p80
      %s83 = sadd.s32 %s82, 1
      %p86 = scmp.eq.s32.totalorder %s13, 1
      %p87 = scmp.ne.s32.totalorder %s82, %s84
      %p88 = scmp.eq.s32.totalorder %s13, 0
      %p89 = por %p87, %p88
      %p90 = scmp.ne.s32.totalorder %s82, %s84
      %p91 = scmp.eq.s32.totalorder %s18, 1
      %p92 = por %p90, %p91
      %p93 = scmp.ne.s32.totalorder %s84, %s85
      %p94 = scmp.eq.s32.totalorder %s18, 0
      %p95 = por %p93, %p94
      %p96 = scmp.ne.s32.totalorder %s84, %s85
      %p97 = scmp.eq.s32.totalorder %s19, 1
      %p98 = por %p96, %p97
      %p100 = scmp.ne.s32.totalorder %s85, %s99
      %p101 = scmp.eq.s32.totalorder %s19, 0
      %p102 = por %p100, %p101
      %s104 = sadd.s32 %s103, 1
      %p107 = scmp.eq.s32.totalorder %s13, 1
      %p108 = scmp.ne.s32.totalorder %s103, %s105
      %p109 = scmp.eq.s32.totalorder %s13, 0
      %p110 = por %p108, %p109
      %p111 = scmp.ne.s32.totalorder %s103, %s105
      %p112 = scmp.eq.s32.totalorder %s18, 1
      %p113 = por %p111, %p112
      %p114 = scmp.ne.s32.totalorder %s105, %s106
      %p115 = scmp.eq.s32.totalorder %s18, 0
      %p116 = por %p114, %p115
      %p117 = scmp.ne.s32.totalorder %s105, %s106
      %p118 = scmp.eq.s32.totalorder %s19, 1
      %p119 = por %p117, %p118
      %p121 = scmp.ne.s32.totalorder %s106, %s120
      %p122 = scmp.eq.s32.totalorder %s19, 0
      %p123 = por %p121, %p122
      %s124 = ssub.s32 %s20, %s32
      %p125 = scmp.eq.s32.totalorder %s124, 0
      %s127 = sadd.s32 %s126, 1
      %s128 = scalar_select %p125, %s126, %s127
      %p131 = pneg %p125
      %p132 = scmp.eq.s32.totalorder %s13, 1
      %p133 = por %p131, %p132
      %p134 = scmp.ne.s32.totalorder %s126, %s129
      %p135 = scmp.eq.s32.totalorder %s13, 0
      %p136 = por %p134, %p135
      %p137 = scmp.ne.s32.totalorder %s126, %s129
      %p138 = scmp.eq.s32.totalorder %s18, 1
      %p139 = por %p137, %p138
      %p140 = scmp.ne.s32.totalorder %s129, %s130
      %p141 = scmp.eq.s32.totalorder %s18, 0
      %p142 = por %p140, %p141
      %p143 = scmp.ne.s32.totalorder %s129, %s130
      %p144 = scmp.eq.s32.totalorder %s19, 1
      %p145 = por %p143, %p144
      %p147 = scmp.ne.s32.totalorder %s130, %s146
      %p148 = scmp.eq.s32.totalorder %s19, 0
      %p149 = por %p147, %p148
      %p150 = scmp.le.s32.totalorder 1, %s13
      %p151 = scmp.lt.s32.totalorder %s13, 3
      %p152 = pnand %p150, %p151
      %p153 = pneg %p152
      // Predicated region
      $region9: #{mlcnnet_forward.1} parent=5 // pred_check
        _
      $region10: #{mlcnnet_forward.1} parent=5 // pred_check_branch
        %155 = sbr.rel (%p152) target = $region12
      $region11: #{mlcnnet_forward.1} parent=5 // pred_region
        %s156 = ssub.s32 %s13, 1
        // Predicated region
        $region13: #{mlcnnet_forward.1} parent=11 // pred_check
          %p157 = pneg %p74
        $region14: #{mlcnnet_forward.1} parent=11 // pred_check_branch
          %159 = sbr.rel (%p157) target = $region16
        $region15: #{mlcnnet_forward.1} parent=11 // pred_region
          _
        $region16: #{mlcnnet_forward.1} parent=11 // pred_fallthru
          _
        // Predicated region
        $region17: #{mlcnnet_forward.1} parent=11 // pred_check
          %p160 = pneg %p95
        $region18: #{mlcnnet_forward.1} parent=11 // pred_check_branch
          %162 = sbr.rel (%p160) target = $region20
        $region19: #{mlcnnet_forward.1} parent=11 // pred_region
          _
        $region20: #{mlcnnet_forward.1} parent=11 // pred_fallthru
          _
        // Predicated region
        $region21: #{mlcnnet_forward.1} parent=11 // pred_check
          %p163 = pneg %p116
        $region22: #{mlcnnet_forward.1} parent=11 // pred_check_branch
          %165 = sbr.rel (%p163) target = $region24
        $region23: #{mlcnnet_forward.1} parent=11 // pred_region
          _
        $region24: #{mlcnnet_forward.1} parent=11 // pred_fallthru
          _
      $region12: #{mlcnnet_forward.1} parent=5 // pred_fallthru
        _
      %p166 = scmp.lt.s32.totalorder %s13, 2
      // Predicated region
      $region25: #{mlcnnet_forward.1} parent=5 // pred_check
        %p167 = pneg %p166
      $region26: #{mlcnnet_forward.1} parent=5 // pred_check_branch
        %169 = sbr.rel (%p167) target = $region28
      $region27: #{mlcnnet_forward.1} parent=5 // pred_region
        // Predicated region
        $region29: #{mlcnnet_forward.1} parent=27 // pred_check
          %p170 = pneg %p47
        $region30: #{mlcnnet_forward.1} parent=27 // pred_check_branch
          %172 = sbr.rel (%p170) target = $region32
        $region31: #{mlcnnet_forward.1} parent=27 // pred_region
          %s173 = smul.u32 32, %s21
          %p174 = scmp.lt.s32.totalorder %s20, 1
          %s175 = scalar_select %p174, %s20, 1
          %p176 = scmp.lt.s32.totalorder %s173, 31
          %s177 = scalar_select %p176, %s173, 31
          %s178 = smul.addr %s175, 32
          %s179 = sadd.s32 %s177, %s178
          %s180 = smul.addr %s179, 4
          %s181 = scalar_lea.vmem %s0, %s180
          %s182 = smul.u32 32, %s21
        $region32: #{mlcnnet_forward.1} parent=27 // pred_fallthru
          _
      $region28: #{mlcnnet_forward.1} parent=5 // pred_fallthru
        _
      %p183 = scmp.le.s32.totalorder 1, %s13
      %p184 = scmp.lt.s32.totalorder %s13, 3
      %p185 = pnand %p183, %p184
      %p186 = pneg %p185
      // Predicated region
      $region33: #{mlcnnet_forward.1} parent=5 // pred_check
        _
      $region34: #{mlcnnet_forward.1} parent=5 // pred_check_branch
        %188 = sbr.rel (%p185) target = $region36
      $region35: #{mlcnnet_forward.1} parent=5 // pred_region
        %s189 = ssub.s32 %s13, 1
        %s190 = smul.u32 32, %s23
        %p191 = scmp.lt.s32.totalorder %s22, 1
        %s192 = scalar_select %p191, %s22, 1
        %p193 = scmp.lt.s32.totalorder %s190, 31
        %s194 = scalar_select %p193, %s190, 31
        %s195 = smul.addr %s192, 32
        %s196 = sadd.s32 %s194, %s195
        %s197 = smul.addr %s196, 4
        %s198 = scalar_lea.vmem %s0, %s197
        %p199 = pneg %p53
        %p200 = pneg %p50
        %p201 = pneg %p74
        %p202 = pneg %p71
        %p203 = pneg %p95
        %p204 = pneg %p92
        %p205 = pneg %p116
        %p206 = pneg %p113
        %p207 = pneg %p142
        %p208 = pneg %p139
        %s209 = sand.u32 %s129, 1
        %s210 = scalar_lea.sflag [#allocation4], %s209
        %s211 = sand.u32 %s129, 1
        %s212 = scalar_lea.vmem [#allocation3], %s211
        %s213 = smul.u32 32, %s23
        %p214 = scmp.lt.s32.totalorder %s22, 1
        %s215 = scalar_select %p214, %s22, 1
        %p216 = scmp.lt.s32.totalorder %s213, 31
        %s217 = scalar_select %p216, %s213, 31
        %s218 = smul.addr %s215, 32
        %s219 = sadd.s32 %s217, %s218
        %s220 = smul.addr %s219, 4
        %s221 = scalar_lea.vmem %s0, %s220
        %s222 = smul.u32 32, %s23
        %p224 = scmp.eq.s32.totalorder %s23, 0
        // Predicated region
        $region37: #{mlcnnet_forward.1} parent=35 // pred_check
          %p225 = pneg %p224
        $region38: #{mlcnnet_forward.1} parent=35 // pred_check_branch
          %227 = sbr.rel (%p225) target = $region40
        $region39: #{mlcnnet_forward.1} parent=35 // pred_region
          %228 = vst [vmem:[#allocation2] sm:$0xff] 0.0
          %229 = vst [vmem:[#allocation2 + $0x8] sm:$0xff] 0.0
          %230 = vst [vmem:[#allocation2 + $0x10] sm:$0xff] 0.0
          %231 = vst [vmem:[#allocation2 + $0x18] sm:$0xff] 0.0
        $region40: #{mlcnnet_forward.1} parent=35 // pred_fallthru
          _
        %v232 = vld [vmem:[%s221] sm:$0xf]
        %v233 = vld [vmem:[%s221 + $0x4] sm:$0xf]
        %v234 = vld [vmem:[%s221 + $0x8] sm:$0xf]
        %v235 = vld [vmem:[%s221 + $0xc] sm:$0xf]
        %v236 = vld [vmem:[%s221 + $0x10] sm:$0xf]
        %v237 = vld [vmem:[%s221 + $0x14] sm:$0xf]
        %v238 = vld [vmem:[%s221 + $0x18] sm:$0xf]
        %v239 = vld [vmem:[%s221 + $0x1c] sm:$0xf]
        %v240 = vld [vmem:[%s221 + $0x20] sm:$0xf]
        %v241 = vld [vmem:[%s221 + $0x24] sm:$0xf]
        %v242 = vld [vmem:[%s221 + $0x28] sm:$0xf]
        %v243 = vld [vmem:[%s221 + $0x2c] sm:$0xf]
        %v244 = vld [vmem:[%s221 + $0x30] sm:$0xf]
        %v245 = vld [vmem:[%s221 + $0x34] sm:$0xf]
        %v246 = vld [vmem:[%s221 + $0x38] sm:$0xf]
        %v247 = vld [vmem:[%s221 + $0x3c] sm:$0xf]
        %v248 = vld [vmem:[%s221 + $0x40] sm:$0xf]
        %v249 = vld [vmem:[%s221 + $0x44] sm:$0xf]
        %v250 = vld [vmem:[%s221 + $0x48] sm:$0xf]
        %v251 = vld [vmem:[%s221 + $0x4c] sm:$0xf]
        %v252 = vld [vmem:[%s221 + $0x50] sm:$0xf]
        %v253 = vld [vmem:[%s221 + $0x54] sm:$0xf]
        %v254 = vld [vmem:[%s221 + $0x58] sm:$0xf]
        %v255 = vld [vmem:[%s221 + $0x5c] sm:$0xf]
        %v256 = vld [vmem:[%s221 + $0x60] sm:$0xf]
        %v257 = vld [vmem:[%s221 + $0x64] sm:$0xf]
        %v258 = vld [vmem:[%s221 + $0x68] sm:$0xf]
        %v259 = vld [vmem:[%s221 + $0x6c] sm:$0xf]
        %v260 = vld [vmem:[%s221 + $0x70] sm:$0xf]
        %v261 = vld [vmem:[%s221 + $0x74] sm:$0xf]
        %v262 = vld [vmem:[%s221 + $0x78] sm:$0xf]
        %v263 = vld [vmem:[%s221 + $0x7c] sm:$0xf]
        %v264 = vld [vmem:[%s1] sm:$0xff]
        %v265 = vld [vmem:[%s1 + $0x8] sm:$0xff]
        %v266 = vld [vmem:[%s1 + $0x10] sm:$0xff]
        %v267 = vld [vmem:[%s1 + $0x18] sm:$0xff]
        %v268 = vld [vmem:[%s1 + $0x20] sm:$0xff]
        %v269 = vld [vmem:[%s1 + $0x28] sm:$0xff]
        %v270 = vld [vmem:[%s1 + $0x30] sm:$0xff]
        %v271 = vld [vmem:[%s1 + $0x38] sm:$0xff]
        %v272 = vld [vmem:[%s1 + $0x40] sm:$0x77]
        %v273 = vld [vmem:[%s1 + $0x48] sm:$0x77]
        %v306 = vunpack.c.l.b16 %v232
        %v307 = vunpack.c.l.b16 %v233
        %v308 = vunpack.c.l.b16 %v234
        %v309 = vunpack.c.l.b16 %v235
        %v310 = vunpack.c.l.b16 %v236
        %v311 = vunpack.c.l.b16 %v237
        %v312 = vunpack.c.l.b16 %v238
        %v313 = vunpack.c.l.b16 %v239
        %v314 = vunpack.c.l.b16 %v240
        %v315 = vunpack.c.l.b16 %v241
        %v316 = vunpack.c.l.b16 %v242
        %v317 = vunpack.c.l.b16 %v243
        %v318 = vunpack.c.l.b16 %v244
        %v319 = vunpack.c.l.b16 %v245
        %v320 = vunpack.c.l.b16 %v246
        %v321 = vunpack.c.l.b16 %v247
        %v322 = vunpack.c.l.b16 %v248
        %v323 = vunpack.c.l.b16 %v249
        %v324 = vunpack.c.l.b16 %v250
        %v325 = vunpack.c.l.b16 %v251
        %v326 = vunpack.c.l.b16 %v252
        %v327 = vunpack.c.l.b16 %v253
        %v328 = vunpack.c.l.b16 %v254
        %v329 = vunpack.c.l.b16 %v255
        %v330 = vunpack.c.l.b16 %v256
        %v331 = vunpack.c.l.b16 %v257
        %v332 = vunpack.c.l.b16 %v258
        %v333 = vunpack.c.l.b16 %v259
        %v334 = vunpack.c.l.b16 %v260
        %v335 = vunpack.c.l.b16 %v261
        %v336 = vunpack.c.l.b16 %v262
        %v337 = vunpack.c.l.b16 %v263
        %v338 = vpack.c.b16 %v307, %v306
        %v339 = vpack.c.b16 %v309, %v308
        %v340 = vpack.c.b16 %v311, %v310
        %v341 = vpack.c.b16 %v313, %v312
        %v342 = vpack.c.b16 %v315, %v314
        %v343 = vpack.c.b16 %v317, %v316
        %v344 = vpack.c.b16 %v319, %v318
        %v345 = vpack.c.b16 %v321, %v320
        %v346 = vpack.c.b16 %v323, %v322
        %v347 = vpack.c.b16 %v325, %v324
        %v348 = vpack.c.b16 %v327, %v326
        %v349 = vpack.c.b16 %v329, %v328
        %v350 = vpack.c.b16 %v331, %v330
        %v351 = vpack.c.b16 %v333, %v332
        %v352 = vpack.c.b16 %v335, %v334
        %v353 = vpack.c.b16 %v337, %v336
        %v364 = vunpack.c.l.b16 %v264
        %v365 = vunpack.c.h.b16 %v264
        %v366 = vunpack.c.l.b16 %v265
        %v367 = vunpack.c.h.b16 %v265
        %v368 = vunpack.c.l.b16 %v266
        %v369 = vunpack.c.h.b16 %v266
        %v370 = vunpack.c.l.b16 %v267
        %v371 = vunpack.c.h.b16 %v267
        %v372 = vunpack.c.l.b16 %v268
        %v373 = vunpack.c.h.b16 %v268
        %v374 = vunpack.c.l.b16 %v269
        %v375 = vunpack.c.h.b16 %v269
        %v376 = vunpack.c.l.b16 %v270
        %v377 = vunpack.c.h.b16 %v270
        %v378 = vunpack.c.l.b16 %v271
        %v379 = vunpack.c.h.b16 %v271
        %v380 = vunpack.c.l.b16 %v272
        %v381 = vunpack.c.h.b16 %v272
        %v382 = vunpack.c.l.b16 %v273
        %v383 = vunpack.c.h.b16 %v273
        %v384 = vpack.c.b16 %v368, %v364
        %v385 = vpack.c.b16 %v369, %v365
        %v386 = vpack.c.b16 %v370, %v366
        %v387 = vpack.c.b16 %v371, %v367
        %v388 = vpack.c.b16 %v376, %v372
        %v389 = vpack.c.b16 %v377, %v373
        %v390 = vpack.c.b16 %v378, %v374
        %v391 = vpack.c.b16 %v379, %v375
        %v392 = vpack.c.b16 %v380, %v380
        %v393 = vpack.c.b16 %v381, %v381
        %v394 = vpack.c.b16 %v382, %v382
        %v395 = vpack.c.b16 %v383, %v383
        %vm404 = vcmask 302080
        %v406 = vsel %vm404, %v338, 0
        %v409 = vsel %vm404, %v339, 0
        %v412 = vsel %vm404, %v340, 0
        %v415 = vsel %vm404, %v341, 0
        %v418 = vsel %vm404, %v342, 0
        %v421 = vsel %vm404, %v343, 0
        %v424 = vsel %vm404, %v344, 0
        %v427 = vsel %vm404, %v345, 0
        %v430 = vsel %vm404, %v346, 0
        %v433 = vsel %vm404, %v347, 0
        %v436 = vsel %vm404, %v348, 0
        %v439 = vsel %vm404, %v349, 0
        %v442 = vsel %vm404, %v350, 0
        %v445 = vsel %vm404, %v351, 0
        %v448 = vsel %vm404, %v352, 0
        %v451 = vsel %vm404, %v353, 0
        %vm453 = vcmask 1041408
        %vm454 = vcmask 1042432
        %v455 = vsel %vm453, 4294967295, 65535
        %v456 = vsel %vm454, %v455, 0
        %v458 = vand.u32 %v392, %v456
        %v461 = vand.u32 %v393, %v456
        %v464 = vand.u32 %v394, %v456
        %v467 = vand.u32 %v395, %v456
        %469 = vmatprep.subr.bf16.mxu0 0
        %470 = vmatpush1.bf16.msra.mxu0 0
        %471 = vmatprep.subr.bf16.mxu0 0
        %472 = vmatpush1.bf16.msra.mxu0 0
        %473 = vmatprep.subr.bf16.mxu0 0
        %474 = vmatpush1.bf16.msra.mxu0 0
        %475 = vmatprep.subr.bf16.mxu0 0
        %476 = vmatpush1.bf16.msra.mxu0 0
        %477 = vmatprep.subr.bf16.mxu0 0
        %478 = vmatpush1.bf16.msra.mxu0 0
        %479 = vmatprep.subr.bf16.mxu0 %v461
        %480 = vmatpush1.bf16.msra.mxu0 %v458
        %481 = vmatprep.subr.bf16.mxu0 %v389
        %482 = vmatpush1.bf16.msra.mxu0 %v388
        %483 = vmatprep.subr.bf16.mxu0 %v385
        %484 = vmatpush1.bf16.msra.mxu0 %v384
        %485 = vmatprep.subr.bf16.mxu0 0
        %486 = vmatpush2.bf16.msra.mxu0 0
        %487 = vmatprep.subr.bf16.mxu0 0
        %488 = vmatpush2.bf16.msra.mxu0 0
        %489 = vmatprep.subr.bf16.mxu0 0
        %490 = vmatpush2.bf16.msra.mxu0 0
        %491 = vmatprep.subr.bf16.mxu0 0
        %492 = vmatpush2.bf16.msra.mxu0 0
        %493 = vmatprep.subr.bf16.mxu0 0
        %494 = vmatpush2.bf16.msra.mxu0 0
        %495 = vmatprep.subr.bf16.mxu0 0
        %496 = vmatpush2.bf16.msra.mxu0 0
        %497 = vmatprep.subr.bf16.mxu0 0
        %498 = vmatpush2.bf16.msra.mxu0 0
        %499 = vmatprep.subr.bf16.mxu0 0
        %500 = vmatpush2.bf16.msra.mxu0 0
        %501 = vmatprep.mubr.bf16.mxu0 0
        %502 = vmatmul.mubr.bf16.gmra.mxu0 %v406
        %v503 = vpop.f32.mrf.mxu0
        %v504 = vadd.f32 0.0, %v503
        %v505 = vpop.f32.mrf.mxu0
        %v506 = vadd.f32 0.0, %v505
        %v507 = vpop.f32.mrf.mxu0
        %v508 = vadd.f32 0.0, %v507
        %v509 = vpop.f32.mrf.mxu0
        %v510 = vadd.f32 0.0, %v509
        %511 = vmatprep.mubr.bf16.mxu0 0
        %512 = vmatmul.mubr.bf16.gmra.mxu0 %v409
        %v513 = vpop.f32.mrf.mxu0
        %v514 = vadd.f32 0.0, %v513
        %v515 = vpop.f32.mrf.mxu0
        %v516 = vadd.f32 0.0, %v515
        %v517 = vpop.f32.mrf.mxu0
        %v518 = vadd.f32 0.0, %v517
        %v519 = vpop.f32.mrf.mxu0
        %v520 = vadd.f32 0.0, %v519
        %521 = vmatprep.mubr.bf16.mxu0 0
        %522 = vmatmul.mubr.bf16.gmra.mxu0 %v412
        %v523 = vpop.f32.mrf.mxu0
        %v524 = vadd.f32 0.0, %v523
        %v525 = vpop.f32.mrf.mxu0
        %v526 = vadd.f32 0.0, %v525
        %v527 = vpop.f32.mrf.mxu0
        %v528 = vadd.f32 0.0, %v527
        %v529 = vpop.f32.mrf.mxu0
        %v530 = vadd.f32 0.0, %v529
        %531 = vmatprep.mubr.bf16.mxu0 0
        %532 = vmatmul.mubr.bf16.gmra.mxu0 %v415
        %v533 = vpop.f32.mrf.mxu0
        %v534 = vadd.f32 0.0, %v533
        %v535 = vpop.f32.mrf.mxu0
        %v536 = vadd.f32 0.0, %v535
        %v537 = vpop.f32.mrf.mxu0
        %v538 = vadd.f32 0.0, %v537
        %v539 = vpop.f32.mrf.mxu0
        %v540 = vadd.f32 0.0, %v539
        %541 = vmatprep.mubr.bf16.mxu0 0
        %542 = vmatmul.mubr.bf16.gmra.mxu0 %v418
        %v543 = vpop.f32.mrf.mxu0
        %v544 = vadd.f32 0.0, %v543
        %v545 = vpop.f32.mrf.mxu0
        %v546 = vadd.f32 0.0, %v545
        %v547 = vpop.f32.mrf.mxu0
        %v548 = vadd.f32 0.0, %v547
        %v549 = vpop.f32.mrf.mxu0
        %v550 = vadd.f32 0.0, %v549
        %551 = vmatprep.mubr.bf16.mxu0 0
        %552 = vmatmul.mubr.bf16.gmra.mxu0 %v421
        %v553 = vpop.f32.mrf.mxu0
        %v554 = vadd.f32 0.0, %v553
        %v555 = vpop.f32.mrf.mxu0
        %v556 = vadd.f32 0.0, %v555
        %v557 = vpop.f32.mrf.mxu0
        %v558 = vadd.f32 0.0, %v557
        %v559 = vpop.f32.mrf.mxu0
        %v560 = vadd.f32 0.0, %v559
        %561 = vmatprep.mubr.bf16.mxu0 0
        %562 = vmatmul.mubr.bf16.gmra.mxu0 %v424
        %v563 = vpop.f32.mrf.mxu0
        %v564 = vadd.f32 0.0, %v563
        %v565 = vpop.f32.mrf.mxu0
        %v566 = vadd.f32 0.0, %v565
        %v567 = vpop.f32.mrf.mxu0
        %v568 = vadd.f32 0.0, %v567
        %v569 = vpop.f32.mrf.mxu0
        %v570 = vadd.f32 0.0, %v569
        %571 = vmatprep.mubr.bf16.mxu0 0
        %572 = vmatmul.mubr.bf16.gmra.mxu0 %v427
        %v573 = vpop.f32.mrf.mxu0
        %v574 = vadd.f32 0.0, %v573
        %v575 = vpop.f32.mrf.mxu0
        %v576 = vadd.f32 0.0, %v575
        %v577 = vpop.f32.mrf.mxu0
        %v578 = vadd.f32 0.0, %v577
        %v579 = vpop.f32.mrf.mxu0
        %v580 = vadd.f32 0.0, %v579
        %581 = vmatprep.mubr.bf16.mxu0 0
        %582 = vmatmul.mubr.bf16.gmra.mxu0 %v430
        %v583 = vpop.f32.mrf.mxu0
        %v584 = vadd.f32 0.0, %v583
        %v585 = vpop.f32.mrf.mxu0
        %v586 = vadd.f32 0.0, %v585
        %v587 = vpop.f32.mrf.mxu0
        %v588 = vadd.f32 0.0, %v587
        %v589 = vpop.f32.mrf.mxu0
        %v590 = vadd.f32 0.0, %v589
        %591 = vmatprep.mubr.bf16.mxu0 0
        %592 = vmatmul.mubr.bf16.gmra.mxu0 %v433
        %v593 = vpop.f32.mrf.mxu0
        %v594 = vadd.f32 0.0, %v593
        %v595 = vpop.f32.mrf.mxu0
        %v596 = vadd.f32 0.0, %v595
        %v597 = vpop.f32.mrf.mxu0
        %v598 = vadd.f32 0.0, %v597
        %v599 = vpop.f32.mrf.mxu0
        %v600 = vadd.f32 0.0, %v599
        %601 = vmatprep.mubr.bf16.mxu0 0
        %602 = vmatmul.mubr.bf16.gmra.mxu0 %v436
        %v603 = vpop.f32.mrf.mxu0
        %v604 = vadd.f32 0.0, %v603
        %v605 = vpop.f32.mrf.mxu0
        %v606 = vadd.f32 0.0, %v605
        %v607 = vpop.f32.mrf.mxu0
        %v608 = vadd.f32 0.0, %v607
        %v609 = vpop.f32.mrf.mxu0
        %v610 = vadd.f32 0.0, %v609
        %611 = vmatprep.mubr.bf16.mxu0 0
        %612 = vmatmul.mubr.bf16.gmra.mxu0 %v439
        %v613 = vpop.f32.mrf.mxu0
        %v614 = vadd.f32 0.0, %v613
        %v615 = vpop.f32.mrf.mxu0
        %v616 = vadd.f32 0.0, %v615
        %v617 = vpop.f32.mrf.mxu0
        %v618 = vadd.f32 0.0, %v617
        %v619 = vpop.f32.mrf.mxu0
        %v620 = vadd.f32 0.0, %v619
        %621 = vmatprep.mubr.bf16.mxu0 0
        %622 = vmatmul.mubr.bf16.gmra.mxu0 %v442
        %v623 = vpop.f32.mrf.mxu0
        %v624 = vadd.f32 0.0, %v623
        %v625 = vpop.f32.mrf.mxu0
        %v626 = vadd.f32 0.0, %v625
        %v627 = vpop.f32.mrf.mxu0
        %v628 = vadd.f32 0.0, %v627
        %v629 = vpop.f32.mrf.mxu0
        %v630 = vadd.f32 0.0, %v629
        %631 = vmatprep.mubr.bf16.mxu0 0
        %632 = vmatmul.mubr.bf16.gmra.mxu0 %v445
        %v633 = vpop.f32.mrf.mxu0
        %v634 = vadd.f32 0.0, %v633
        %v635 = vpop.f32.mrf.mxu0
        %v636 = vadd.f32 0.0, %v635
        %v637 = vpop.f32.mrf.mxu0
        %v638 = vadd.f32 0.0, %v637
        %v639 = vpop.f32.mrf.mxu0
        %v640 = vadd.f32 0.0, %v639
        %641 = vmatprep.mubr.bf16.mxu0 0
        %642 = vmatmul.mubr.bf16.gmra.mxu0 %v448
        %v643 = vpop.f32.mrf.mxu0
        %v644 = vadd.f32 0.0, %v643
        %v645 = vpop.f32.mrf.mxu0
        %v646 = vadd.f32 0.0, %v645
        %v647 = vpop.f32.mrf.mxu0
        %v648 = vadd.f32 0.0, %v647
        %v649 = vpop.f32.mrf.mxu0
        %v650 = vadd.f32 0.0, %v649
        %651 = vmatprep.mubr.bf16.mxu0 0
        %652 = vmatmul.mubr.bf16.gmra.mxu0 %v451
        %v653 = vpop.f32.mrf.mxu0
        %v654 = vadd.f32 0.0, %v653
        %v655 = vpop.f32.mrf.mxu0
        %v656 = vadd.f32 0.0, %v655
        %v657 = vpop.f32.mrf.mxu0
        %v658 = vadd.f32 0.0, %v657
        %v659 = vpop.f32.mrf.mxu0
        %v660 = vadd.f32 0.0, %v659
        %661 = vdwg.mxu0
        %662 = vmatprep.subr.bf16.mxu0 0
        %663 = vmatpush1.bf16.msra.mxu0 0
        %664 = vmatprep.subr.bf16.mxu0 0
        %665 = vmatpush1.bf16.msra.mxu0 0
        %666 = vmatprep.subr.bf16.mxu0 0
        %667 = vmatpush1.bf16.msra.mxu0 0
        %668 = vmatprep.subr.bf16.mxu0 0
        %669 = vmatpush1.bf16.msra.mxu0 0
        %670 = vmatprep.subr.bf16.mxu0 0
        %671 = vmatpush1.bf16.msra.mxu0 0
        %672 = vmatprep.subr.bf16.mxu0 %v467
        %673 = vmatpush1.bf16.msra.mxu0 %v464
        %674 = vmatprep.subr.bf16.mxu0 %v391
        %675 = vmatpush1.bf16.msra.mxu0 %v390
        %676 = vmatprep.subr.bf16.mxu0 %v387
        %677 = vmatpush1.bf16.msra.mxu0 %v386
        %678 = vmatprep.subr.bf16.mxu0 0
        %679 = vmatpush2.bf16.msra.mxu0 0
        %680 = vmatprep.subr.bf16.mxu0 0
        %681 = vmatpush2.bf16.msra.mxu0 0
        %682 = vmatprep.subr.bf16.mxu0 0
        %683 = vmatpush2.bf16.msra.mxu0 0
        %684 = vmatprep.subr.bf16.mxu0 0
        %685 = vmatpush2.bf16.msra.mxu0 0
        %686 = vmatprep.subr.bf16.mxu0 0
        %687 = vmatpush2.bf16.msra.mxu0 0
        %688 = vmatprep.subr.bf16.mxu0 0
        %689 = vmatpush2.bf16.msra.mxu0 0
        %690 = vmatprep.subr.bf16.mxu0 0
        %691 = vmatpush2.bf16.msra.mxu0 0
        %692 = vmatprep.subr.bf16.mxu0 0
        %693 = vmatpush2.bf16.msra.mxu0 0
        %694 = vmatprep.mubr.bf16.mxu0 0
        %695 = vmatmul.mubr.bf16.gmra.mxu0 %v406
        %v696 = vpop.f32.mrf.mxu0
        %v697 = vadd.f32 0.0, %v696
        %v698 = vpop.f32.mrf.mxu0
        %v699 = vadd.f32 0.0, %v698
        %v700 = vpop.f32.mrf.mxu0
        %v701 = vadd.f32 0.0, %v700
        %v702 = vpop.f32.mrf.mxu0
        %v703 = vadd.f32 0.0, %v702
        %704 = vmatprep.mubr.bf16.mxu0 0
        %705 = vmatmul.mubr.bf16.gmra.mxu0 %v409
        %v706 = vpop.f32.mrf.mxu0
        %v707 = vadd.f32 0.0, %v706
        %v708 = vpop.f32.mrf.mxu0
        %v709 = vadd.f32 0.0, %v708
        %v710 = vpop.f32.mrf.mxu0
        %v711 = vadd.f32 0.0, %v710
        %v712 = vpop.f32.mrf.mxu0
        %v713 = vadd.f32 0.0, %v712
        %714 = vmatprep.mubr.bf16.mxu0 0
        %715 = vmatmul.mubr.bf16.gmra.mxu0 %v412
        %v716 = vpop.f32.mrf.mxu0
        %v717 = vadd.f32 0.0, %v716
        %v718 = vpop.f32.mrf.mxu0
        %v719 = vadd.f32 0.0, %v718
        %v720 = vpop.f32.mrf.mxu0
        %v721 = vadd.f32 0.0, %v720
        %v722 = vpop.f32.mrf.mxu0
        %v723 = vadd.f32 0.0, %v722
        %724 = vmatprep.mubr.bf16.mxu0 0
        %725 = vmatmul.mubr.bf16.gmra.mxu0 %v415
        %v726 = vpop.f32.mrf.mxu0
        %v727 = vadd.f32 0.0, %v726
        %v728 = vpop.f32.mrf.mxu0
        %v729 = vadd.f32 0.0, %v728
        %v730 = vpop.f32.mrf.mxu0
        %v731 = vadd.f32 0.0, %v730
        %v732 = vpop.f32.mrf.mxu0
        %v733 = vadd.f32 0.0, %v732
        %734 = vmatprep.mubr.bf16.mxu0 0
        %735 = vmatmul.mubr.bf16.gmra.mxu0 %v418
        %v736 = vpop.f32.mrf.mxu0
        %v737 = vadd.f32 0.0, %v736
        %v738 = vpop.f32.mrf.mxu0
        %v739 = vadd.f32 0.0, %v738
        %v740 = vpop.f32.mrf.mxu0
        %v741 = vadd.f32 0.0, %v740
        %v742 = vpop.f32.mrf.mxu0
        %v743 = vadd.f32 0.0, %v742
        %744 = vmatprep.mubr.bf16.mxu0 0
        %745 = vmatmul.mubr.bf16.gmra.mxu0 %v421
        %v746 = vpop.f32.mrf.mxu0
        %v747 = vadd.f32 0.0, %v746
        %v748 = vpop.f32.mrf.mxu0
        %v749 = vadd.f32 0.0, %v748
        %v750 = vpop.f32.mrf.mxu0
        %v751 = vadd.f32 0.0, %v750
        %v752 = vpop.f32.mrf.mxu0
        %v753 = vadd.f32 0.0, %v752
        %754 = vmatprep.mubr.bf16.mxu0 0
        %755 = vmatmul.mubr.bf16.gmra.mxu0 %v424
        %v756 = vpop.f32.mrf.mxu0
        %v757 = vadd.f32 0.0, %v756
        %v758 = vpop.f32.mrf.mxu0
        %v759 = vadd.f32 0.0, %v758
        %v760 = vpop.f32.mrf.mxu0
        %v761 = vadd.f32 0.0, %v760
        %v762 = vpop.f32.mrf.mxu0
        %v763 = vadd.f32 0.0, %v762
        %764 = vmatprep.mubr.bf16.mxu0 0
        %765 = vmatmul.mubr.bf16.gmra.mxu0 %v427
        %v766 = vpop.f32.mrf.mxu0
        %v767 = vadd.f32 0.0, %v766
        %v768 = vpop.f32.mrf.mxu0
        %v769 = vadd.f32 0.0, %v768
        %v770 = vpop.f32.mrf.mxu0
        %v771 = vadd.f32 0.0, %v770
        %v772 = vpop.f32.mrf.mxu0
        %v773 = vadd.f32 0.0, %v772
        %774 = vmatprep.mubr.bf16.mxu0 0
        %775 = vmatmul.mubr.bf16.gmra.mxu0 %v430
        %v776 = vpop.f32.mrf.mxu0
        %v777 = vadd.f32 0.0, %v776
        %v778 = vpop.f32.mrf.mxu0
        %v779 = vadd.f32 0.0, %v778
        %v780 = vpop.f32.mrf.mxu0
        %v781 = vadd.f32 0.0, %v780
        %v782 = vpop.f32.mrf.mxu0
        %v783 = vadd.f32 0.0, %v782
        %784 = vmatprep.mubr.bf16.mxu0 0
        %785 = vmatmul.mubr.bf16.gmra.mxu0 %v433
        %v786 = vpop.f32.mrf.mxu0
        %v787 = vadd.f32 0.0, %v786
        %v788 = vpop.f32.mrf.mxu0
        %v789 = vadd.f32 0.0, %v788
        %v790 = vpop.f32.mrf.mxu0
        %v791 = vadd.f32 0.0, %v790
        %v792 = vpop.f32.mrf.mxu0
        %v793 = vadd.f32 0.0, %v792
        %794 = vmatprep.mubr.bf16.mxu0 0
        %795 = vmatmul.mubr.bf16.gmra.mxu0 %v436
        %v796 = vpop.f32.mrf.mxu0
        %v797 = vadd.f32 0.0, %v796
        %v798 = vpop.f32.mrf.mxu0
        %v799 = vadd.f32 0.0, %v798
        %v800 = vpop.f32.mrf.mxu0
        %v801 = vadd.f32 0.0, %v800
        %v802 = vpop.f32.mrf.mxu0
        %v803 = vadd.f32 0.0, %v802
        %804 = vmatprep.mubr.bf16.mxu0 0
        %805 = vmatmul.mubr.bf16.gmra.mxu0 %v439
        %v806 = vpop.f32.mrf.mxu0
        %v807 = vadd.f32 0.0, %v806
        %v808 = vpop.f32.mrf.mxu0
        %v809 = vadd.f32 0.0, %v808
        %v810 = vpop.f32.mrf.mxu0
        %v811 = vadd.f32 0.0, %v810
        %v812 = vpop.f32.mrf.mxu0
        %v813 = vadd.f32 0.0, %v812
        %814 = vmatprep.mubr.bf16.mxu0 0
        %815 = vmatmul.mubr.bf16.gmra.mxu0 %v442
        %v816 = vpop.f32.mrf.mxu0
        %v817 = vadd.f32 0.0, %v816
        %v818 = vpop.f32.mrf.mxu0
        %v819 = vadd.f32 0.0, %v818
        %v820 = vpop.f32.mrf.mxu0
        %v821 = vadd.f32 0.0, %v820
        %v822 = vpop.f32.mrf.mxu0
        %v823 = vadd.f32 0.0, %v822
        %824 = vmatprep.mubr.bf16.mxu0 0
        %825 = vmatmul.mubr.bf16.gmra.mxu0 %v445
        %v826 = vpop.f32.mrf.mxu0
        %v827 = vadd.f32 0.0, %v826
        %v828 = vpop.f32.mrf.mxu0
        %v829 = vadd.f32 0.0, %v828
        %v830 = vpop.f32.mrf.mxu0
        %v831 = vadd.f32 0.0, %v830
        %v832 = vpop.f32.mrf.mxu0
        %v833 = vadd.f32 0.0, %v832
        %834 = vmatprep.mubr.bf16.mxu0 0
        %835 = vmatmul.mubr.bf16.gmra.mxu0 %v448
        %v836 = vpop.f32.mrf.mxu0
        %v837 = vadd.f32 0.0, %v836
        %v838 = vpop.f32.mrf.mxu0
        %v839 = vadd.f32 0.0, %v838
        %v840 = vpop.f32.mrf.mxu0
        %v841 = vadd.f32 0.0, %v840
        %v842 = vpop.f32.mrf.mxu0
        %v843 = vadd.f32 0.0, %v842
        %844 = vmatprep.mubr.bf16.mxu0 0
        %845 = vmatmul.mubr.bf16.gmra.mxu0 %v451
        %v846 = vpop.f32.mrf.mxu0
        %v847 = vadd.f32 0.0, %v846
        %v848 = vpop.f32.mrf.mxu0
        %v849 = vadd.f32 0.0, %v848
        %v850 = vpop.f32.mrf.mxu0
        %v851 = vadd.f32 0.0, %v850
        %v852 = vpop.f32.mrf.mxu0
        %v853 = vadd.f32 0.0, %v852
        %854 = vdwg.mxu0
        %v855 = vmax.f32 %v504, 0.0
        %v856 = vmax.f32 %v506, 0.0
        %v857 = vmax.f32 %v697, 0.0
        %v858 = vmax.f32 %v699, 0.0
        %v859 = vmax.f32 %v508, 0.0
        %v860 = vmax.f32 %v510, 0.0
        %v861 = vmax.f32 %v701, 0.0
        %v862 = vmax.f32 %v703, 0.0
        %v863 = vmax.f32 %v514, 0.0
        %v864 = vmax.f32 %v516, 0.0
        %v865 = vmax.f32 %v707, 0.0
        %v866 = vmax.f32 %v709, 0.0
        %v867 = vmax.f32 %v518, 0.0
        %v868 = vmax.f32 %v520, 0.0
        %v869 = vmax.f32 %v711, 0.0
        %v870 = vmax.f32 %v713, 0.0
        %v871 = vmax.f32 %v524, 0.0
        %v872 = vmax.f32 %v526, 0.0
        %v873 = vmax.f32 %v717, 0.0
        %v874 = vmax.f32 %v719, 0.0
        %v875 = vmax.f32 %v528, 0.0
        %v876 = vmax.f32 %v530, 0.0
        %v877 = vmax.f32 %v721, 0.0
        %v878 = vmax.f32 %v723, 0.0
        %v879 = vmax.f32 %v534, 0.0
        %v880 = vmax.f32 %v536, 0.0
        %v881 = vmax.f32 %v727, 0.0
        %v882 = vmax.f32 %v729, 0.0
        %v883 = vmax.f32 %v538, 0.0
        %v884 = vmax.f32 %v540, 0.0
        %v885 = vmax.f32 %v731, 0.0
        %v886 = vmax.f32 %v733, 0.0
        %v887 = vmax.f32 %v544, 0.0
        %v888 = vmax.f32 %v546, 0.0
        %v889 = vmax.f32 %v737, 0.0
        %v890 = vmax.f32 %v739, 0.0
        %v891 = vmax.f32 %v548, 0.0
        %v892 = vmax.f32 %v550, 0.0
        %v893 = vmax.f32 %v741, 0.0
        %v894 = vmax.f32 %v743, 0.0
        %v895 = vmax.f32 %v554, 0.0
        %v896 = vmax.f32 %v556, 0.0
        %v897 = vmax.f32 %v747, 0.0
        %v898 = vmax.f32 %v749, 0.0
        %v899 = vmax.f32 %v558, 0.0
        %v900 = vmax.f32 %v560, 0.0
        %v901 = vmax.f32 %v751, 0.0
        %v902 = vmax.f32 %v753, 0.0
        %v903 = vmax.f32 %v564, 0.0
        %v904 = vmax.f32 %v566, 0.0
        %v905 = vmax.f32 %v757, 0.0
        %v906 = vmax.f32 %v759, 0.0
        %v907 = vmax.f32 %v568, 0.0
        %v908 = vmax.f32 %v570, 0.0
        %v909 = vmax.f32 %v761, 0.0
        %v910 = vmax.f32 %v763, 0.0
        %v911 = vmax.f32 %v574, 0.0
        %v912 = vmax.f32 %v576, 0.0
        %v913 = vmax.f32 %v767, 0.0
        %v914 = vmax.f32 %v769, 0.0
        %v915 = vmax.f32 %v578, 0.0
        %v916 = vmax.f32 %v580, 0.0
        %v917 = vmax.f32 %v771, 0.0
        %v918 = vmax.f32 %v773, 0.0
        %v919 = vmax.f32 %v584, 0.0
        %v920 = vmax.f32 %v586, 0.0
        %v921 = vmax.f32 %v777, 0.0
        %v922 = vmax.f32 %v779, 0.0
        %v923 = vmax.f32 %v588, 0.0
        %v924 = vmax.f32 %v590, 0.0
        %v925 = vmax.f32 %v781, 0.0
        %v926 = vmax.f32 %v783, 0.0
        %v927 = vmax.f32 %v594, 0.0
        %v928 = vmax.f32 %v596, 0.0
        %v929 = vmax.f32 %v787, 0.0
        %v930 = vmax.f32 %v789, 0.0
        %v931 = vmax.f32 %v598, 0.0
        %v932 = vmax.f32 %v600, 0.0
        %v933 = vmax.f32 %v791, 0.0
        %v934 = vmax.f32 %v793, 0.0
        %v935 = vmax.f32 %v604, 0.0
        %v936 = vmax.f32 %v606, 0.0
        %v937 = vmax.f32 %v797, 0.0
        %v938 = vmax.f32 %v799, 0.0
        %v939 = vmax.f32 %v608, 0.0
        %v940 = vmax.f32 %v610, 0.0
        %v941 = vmax.f32 %v801, 0.0
        %v942 = vmax.f32 %v803, 0.0
        %v943 = vmax.f32 %v614, 0.0
        %v944 = vmax.f32 %v616, 0.0
        %v945 = vmax.f32 %v807, 0.0
        %v946 = vmax.f32 %v809, 0.0
        %v947 = vmax.f32 %v618, 0.0
        %v948 = vmax.f32 %v620, 0.0
        %v949 = vmax.f32 %v811, 0.0
        %v950 = vmax.f32 %v813, 0.0
        %v951 = vmax.f32 %v624, 0.0
        %v952 = vmax.f32 %v626, 0.0
        %v953 = vmax.f32 %v817, 0.0
        %v954 = vmax.f32 %v819, 0.0
        %v955 = vmax.f32 %v628, 0.0
        %v956 = vmax.f32 %v630, 0.0
        %v957 = vmax.f32 %v821, 0.0
        %v958 = vmax.f32 %v823, 0.0
        %v959 = vmax.f32 %v634, 0.0
        %v960 = vmax.f32 %v636, 0.0
        %v961 = vmax.f32 %v827, 0.0
        %v962 = vmax.f32 %v829, 0.0
        %v963 = vmax.f32 %v638, 0.0
        %v964 = vmax.f32 %v640, 0.0
        %v965 = vmax.f32 %v831, 0.0
        %v966 = vmax.f32 %v833, 0.0
        %v967 = vmax.f32 %v644, 0.0
        %v968 = vmax.f32 %v646, 0.0
        %v969 = vmax.f32 %v837, 0.0
        %v970 = vmax.f32 %v839, 0.0
        %v971 = vmax.f32 %v648, 0.0
        %v972 = vmax.f32 %v650, 0.0
        %v973 = vmax.f32 %v841, 0.0
        %v974 = vmax.f32 %v843, 0.0
        %v975 = vmax.f32 %v654, 0.0
        %v976 = vmax.f32 %v656, 0.0
        %v977 = vmax.f32 %v847, 0.0
        %v978 = vmax.f32 %v849, 0.0
        %v979 = vmax.f32 %v658, 0.0
        %v980 = vmax.f32 %v660, 0.0
        %v981 = vmax.f32 %v851, 0.0
        %v982 = vmax.f32 %v853, 0.0
        %v983 = vld [vmem:[#allocation2] sm:$0xff]
        %v984 = vld [vmem:[#allocation2 + $0x8] sm:$0xff]
        %v985 = vld [vmem:[#allocation2 + $0x10] sm:$0xff]
        %v986 = vld [vmem:[#allocation2 + $0x18] sm:$0xff]
        %v987 = vadd.f32 %v855, %v859
        %v988 = vadd.f32 %v987, %v863
        %v989 = vadd.f32 %v988, %v867
        %v990 = vadd.f32 %v989, %v871
        %v991 = vadd.f32 %v990, %v875
        %v992 = vadd.f32 %v991, %v879
        %v993 = vadd.f32 %v992, %v883
        %v994 = vadd.f32 %v993, %v887
        %v995 = vadd.f32 %v994, %v891
        %v996 = vadd.f32 %v995, %v895
        %v997 = vadd.f32 %v996, %v899
        %v998 = vadd.f32 %v997, %v903
        %v999 = vadd.f32 %v998, %v907
        %v1000 = vadd.f32 %v999, %v911
        %v1001 = vadd.f32 %v1000, %v915
        %v1002 = vadd.f32 %v1001, %v919
        %v1003 = vadd.f32 %v1002, %v923
        %v1004 = vadd.f32 %v1003, %v927
        %v1005 = vadd.f32 %v1004, %v931
        %v1006 = vadd.f32 %v1005, %v935
        %v1007 = vadd.f32 %v1006, %v939
        %v1008 = vadd.f32 %v1007, %v943
        %v1009 = vadd.f32 %v1008, %v947
        %v1010 = vadd.f32 %v1009, %v951
        %v1011 = vadd.f32 %v1010, %v955
        %v1012 = vadd.f32 %v1011, %v959
        %v1013 = vadd.f32 %v1012, %v963
        %v1014 = vadd.f32 %v1013, %v967
        %v1015 = vadd.f32 %v1014, %v971
        %v1016 = vadd.f32 %v1015, %v975
        %v1017 = vadd.f32 %v1016, %v979
        %v1018 = vadd.f32 %v856, %v860
        %v1019 = vadd.f32 %v1018, %v864
        %v1020 = vadd.f32 %v1019, %v868
        %v1021 = vadd.f32 %v1020, %v872
        %v1022 = vadd.f32 %v1021, %v876
        %v1023 = vadd.f32 %v1022, %v880
        %v1024 = vadd.f32 %v1023, %v884
        %v1025 = vadd.f32 %v1024, %v888
        %v1026 = vadd.f32 %v1025, %v892
        %v1027 = vadd.f32 %v1026, %v896
        %v1028 = vadd.f32 %v1027, %v900
        %v1029 = vadd.f32 %v1028, %v904
        %v1030 = vadd.f32 %v1029, %v908
        %v1031 = vadd.f32 %v1030, %v912
        %v1032 = vadd.f32 %v1031, %v916
        %v1033 = vadd.f32 %v1032, %v920
        %v1034 = vadd.f32 %v1033, %v924
        %v1035 = vadd.f32 %v1034, %v928
        %v1036 = vadd.f32 %v1035, %v932
        %v1037 = vadd.f32 %v1036, %v936
        %v1038 = vadd.f32 %v1037, %v940
        %v1039 = vadd.f32 %v1038, %v944
        %v1040 = vadd.f32 %v1039, %v948
        %v1041 = vadd.f32 %v1040, %v952
        %v1042 = vadd.f32 %v1041, %v956
        %v1043 = vadd.f32 %v1042, %v960
        %v1044 = vadd.f32 %v1043, %v964
        %v1045 = vadd.f32 %v1044, %v968
        %v1046 = vadd.f32 %v1045, %v972
        %v1047 = vadd.f32 %v1046, %v976
        %v1048 = vadd.f32 %v1047, %v980
        %v1049 = vadd.f32 %v857, %v861
        %v1050 = vadd.f32 %v1049, %v865
        %v1051 = vadd.f32 %v1050, %v869
        %v1052 = vadd.f32 %v1051, %v873
        %v1053 = vadd.f32 %v1052, %v877
        %v1054 = vadd.f32 %v1053, %v881
        %v1055 = vadd.f32 %v1054, %v885
        %v1056 = vadd.f32 %v1055, %v889
        %v1057 = vadd.f32 %v1056, %v893
        %v1058 = vadd.f32 %v1057, %v897
        %v1059 = vadd.f32 %v1058, %v901
        %v1060 = vadd.f32 %v1059, %v905
        %v1061 = vadd.f32 %v1060, %v909
        %v1062 = vadd.f32 %v1061, %v913
        %v1063 = vadd.f32 %v1062, %v917
        %v1064 = vadd.f32 %v1063, %v921
        %v1065 = vadd.f32 %v1064, %v925
        %v1066 = vadd.f32 %v1065, %v929
        %v1067 = vadd.f32 %v1066, %v933
        %v1068 = vadd.f32 %v1067, %v937
        %v1069 = vadd.f32 %v1068, %v941
        %v1070 = vadd.f32 %v1069, %v945
        %v1071 = vadd.f32 %v1070, %v949
        %v1072 = vadd.f32 %v1071, %v953
        %v1073 = vadd.f32 %v1072, %v957
        %v1074 = vadd.f32 %v1073, %v961
        %v1075 = vadd.f32 %v1074, %v965
        %v1076 = vadd.f32 %v1075, %v969
        %v1077 = vadd.f32 %v1076, %v973
        %v1078 = vadd.f32 %v1077, %v977
        %v1079 = vadd.f32 %v1078, %v981
        %v1080 = vadd.f32 %v858, %v862
        %v1081 = vadd.f32 %v1080, %v866
        %v1082 = vadd.f32 %v1081, %v870
        %v1083 = vadd.f32 %v1082, %v874
        %v1084 = vadd.f32 %v1083, %v878
        %v1085 = vadd.f32 %v1084, %v882
        %v1086 = vadd.f32 %v1085, %v886
        %v1087 = vadd.f32 %v1086, %v890
        %v1088 = vadd.f32 %v1087, %v894
        %v1089 = vadd.f32 %v1088, %v898
        %v1090 = vadd.f32 %v1089, %v902
        %v1091 = vadd.f32 %v1090, %v906
        %v1092 = vadd.f32 %v1091, %v910
        %v1093 = vadd.f32 %v1092, %v914
        %v1094 = vadd.f32 %v1093, %v918
        %v1095 = vadd.f32 %v1094, %v922
        %v1096 = vadd.f32 %v1095, %v926
        %v1097 = vadd.f32 %v1096, %v930
        %v1098 = vadd.f32 %v1097, %v934
        %v1099 = vadd.f32 %v1098, %v938
        %v1100 = vadd.f32 %v1099, %v942
        %v1101 = vadd.f32 %v1100, %v946
        %v1102 = vadd.f32 %v1101, %v950
        %v1103 = vadd.f32 %v1102, %v954
        %v1104 = vadd.f32 %v1103, %v958
        %v1105 = vadd.f32 %v1104, %v962
        %v1106 = vadd.f32 %v1105, %v966
        %v1107 = vadd.f32 %v1106, %v970
        %v1108 = vadd.f32 %v1107, %v974
        %v1109 = vadd.f32 %v1108, %v978
        %v1110 = vadd.f32 %v1109, %v982
        %v1111 = vadd.f32 %v983, %v1017
        %v1112 = vadd.f32 %v984, %v1048
        %v1113 = vadd.f32 %v985, %v1079
        %v1114 = vadd.f32 %v986, %v1110
        %1115 = vst [vmem:[#allocation2] sm:$0xff] %v1111
        %1116 = vst [vmem:[#allocation2 + $0x8] sm:$0xff] %v1112
        %1117 = vst [vmem:[#allocation2 + $0x10] sm:$0xff] %v1113
        %1118 = vst [vmem:[#allocation2 + $0x18] sm:$0xff] %v1114
        // Predicated region
        $region41: #{mlcnnet_forward.1} parent=35 // pred_check
          %p1119 = pneg %p224
        $region42: #{mlcnnet_forward.1} parent=35 // pred_check_branch
          %1121 = sbr.rel (%p1119) target = $region44
        $region43: #{mlcnnet_forward.1} parent=35 // pred_region
          %v1122 = vld [vmem:[#allocation2] sm:$0xff]
          %v1123 = vld [vmem:[#allocation2 + $0x8] sm:$0xff]
          %v1124 = vld [vmem:[#allocation2 + $0x10] sm:$0xff]
          %v1125 = vld [vmem:[#allocation2 + $0x18] sm:$0xff]
          %v1126 = vrot.slane %v1122, 4
          %v1127 = vadd.f32 %v1122, %v1126
          %v1128 = vrot.slane %v1127, 2
          %v1129 = vadd.f32 %v1127, %v1128
          %v1130 = vrot.slane %v1129, 1
          %v1131 = vadd.f32 %v1129, %v1130
          %v1132 = vrot.slane %v1123, 4
          %v1133 = vadd.f32 %v1123, %v1132
          %v1134 = vrot.slane %v1133, 2
          %v1135 = vadd.f32 %v1133, %v1134
          %v1136 = vrot.slane %v1135, 1
          %v1137 = vadd.f32 %v1135, %v1136
          %v1138 = vrot.slane %v1124, 4
          %v1139 = vadd.f32 %v1124, %v1138
          %v1140 = vrot.slane %v1139, 2
          %v1141 = vadd.f32 %v1139, %v1140
          %v1142 = vrot.slane %v1141, 1
          %v1143 = vadd.f32 %v1141, %v1142
          %v1144 = vrot.slane %v1125, 4
          %v1145 = vadd.f32 %v1125, %v1144
          %v1146 = vrot.slane %v1145, 2
          %v1147 = vadd.f32 %v1145, %v1146
          %v1148 = vrot.slane %v1147, 1
          %v1149 = vadd.f32 %v1147, %v1148
          %v1150 = vmul.f32 %v1131, 0.00390625
          %v1151 = vmul.f32 %v1137, 0.00390625
          %v1152 = vmul.f32 %v1143, 0.00390625
          %v1153 = vmul.f32 %v1149, 0.00390625
          %v1154 = vpack.c.bf16 %v1150, %v1150
          %v1155 = vpack.c.bf16 %v1151, %v1151
          %v1156 = vpack.c.bf16 %v1152, %v1152
          %v1157 = vpack.c.bf16 %v1153, %v1153
          %v1158 = vld [vmem:[%s2] sm:$0xf]
          %v1159 = vld [vmem:[%s2 + $0x4] sm:$0xf]
          %v1160 = vld [vmem:[%s2 + $0x8] sm:$0xf]
          %v1161 = vld [vmem:[%s2 + $0xc] sm:$0xf]
          %v1162 = vld [vmem:[%s2 + $0x10] sm:$0xf]
          %v1163 = vld [vmem:[%s2 + $0x14] sm:$0xf]
          %v1164 = vld [vmem:[%s2 + $0x18] sm:$0xf]
          %v1165 = vld [vmem:[%s2 + $0x1c] sm:$0xf]
          %v1166 = vld [vmem:[%s2 + $0x20] sm:$0xf]
          %v1167 = vld [vmem:[%s2 + $0x24] sm:$0xf]
          %v1168 = vld [vmem:[%s2 + $0x28] sm:$0xf]
          %v1169 = vld [vmem:[%s2 + $0x2c] sm:$0xf]
          %v1170 = vld [vmem:[%s2 + $0x30] sm:$0xf]
          %v1171 = vld [vmem:[%s2 + $0x34] sm:$0xf]
          %v1172 = vld [vmem:[%s2 + $0x38] sm:$0xf]
          %v1173 = vld [vmem:[%s2 + $0x3c] sm:$0xf]
          %v1174 = vld [vmem:[%s2 + $0x40] sm:$0xf]
          %v1175 = vld [vmem:[%s2 + $0x44] sm:$0xf]
          %v1176 = vld [vmem:[%s2 + $0x48] sm:$0xf]
          %v1177 = vld [vmem:[%s2 + $0x4c] sm:$0xf]
          %v1178 = vld [vmem:[%s2 + $0x50] sm:$0xf]
          %v1179 = vld [vmem:[%s2 + $0x54] sm:$0xf]
          %v1180 = vld [vmem:[%s2 + $0x58] sm:$0xf]
          %v1181 = vld [vmem:[%s2 + $0x5c] sm:$0xf]
          %v1182 = vld [vmem:[%s2 + $0x60] sm:$0xf]
          %v1183 = vld [vmem:[%s2 + $0x64] sm:$0xf]
          %v1184 = vld [vmem:[%s2 + $0x68] sm:$0xf]
          %v1185 = vld [vmem:[%s2 + $0x6c] sm:$0xf]
          %v1186 = vld [vmem:[%s2 + $0x70] sm:$0xf]
          %v1187 = vld [vmem:[%s2 + $0x74] sm:$0xf]
          %v1188 = vld [vmem:[%s2 + $0x78] sm:$0xf]
          %v1189 = vld [vmem:[%s2 + $0x7c] sm:$0xf]
          %v1190 = vld [vmem:[%s2 + $0x80] sm:$0xf]
          %v1191 = vld [vmem:[%s2 + $0x84] sm:$0xf]
          %v1192 = vld [vmem:[%s2 + $0x88] sm:$0xf]
          %v1193 = vld [vmem:[%s2 + $0x8c] sm:$0xf]
          %v1194 = vld [vmem:[%s2 + $0x90] sm:$0xf]
          %v1195 = vld [vmem:[%s2 + $0x94] sm:$0xf]
          %v1196 = vld [vmem:[%s2 + $0x98] sm:$0xf]
          %v1197 = vld [vmem:[%s2 + $0x9c] sm:$0xf]
          %v1198 = vld [vmem:[%s2 + $0xa0] sm:$0xf]
          %v1199 = vld [vmem:[%s2 + $0xa4] sm:$0xf]
          %v1200 = vld [vmem:[%s2 + $0xa8] sm:$0xf]
          %v1201 = vld [vmem:[%s2 + $0xac] sm:$0xf]
          %v1202 = vld [vmem:[%s2 + $0xb0] sm:$0xf]
          %v1203 = vld [vmem:[%s2 + $0xb4] sm:$0xf]
          %v1204 = vld [vmem:[%s2 + $0xb8] sm:$0xf]
          %v1205 = vld [vmem:[%s2 + $0xbc] sm:$0xf]
          %v1206 = vld [vmem:[%s2 + $0xc0] sm:$0xf]
          %v1207 = vld [vmem:[%s2 + $0xc4] sm:$0xf]
          %v1208 = vld [vmem:[%s2 + $0xc8] sm:$0xf]
          %v1209 = vld [vmem:[%s2 + $0xcc] sm:$0xf]
          %v1210 = vld [vmem:[%s2 + $0xd0] sm:$0xf]
          %v1211 = vld [vmem:[%s2 + $0xd4] sm:$0xf]
          %v1212 = vld [vmem:[%s2 + $0xd8] sm:$0xf]
          %v1213 = vld [vmem:[%s2 + $0xdc] sm:$0xf]
          %v1214 = vld [vmem:[%s2 + $0xe0] sm:$0xf]
          %v1215 = vld [vmem:[%s2 + $0xe4] sm:$0xf]
          %v1216 = vld [vmem:[%s2 + $0xe8] sm:$0xf]
          %v1217 = vld [vmem:[%s2 + $0xec] sm:$0xf]
          %v1218 = vld [vmem:[%s2 + $0xf0] sm:$0xf]
          %v1219 = vld [vmem:[%s2 + $0xf4] sm:$0xf]
          %v1220 = vld [vmem:[%s2 + $0xf8] sm:$0xf]
          %v1221 = vld [vmem:[%s2 + $0xfc] sm:$0xf]
          %v1222 = vld [vmem:[%s3] sm:$0x1]
          %v1287 = vunpack.c.l.b16 %v1158
          %v1288 = vunpack.c.l.b16 %v1159
          %v1289 = vunpack.c.l.b16 %v1160
          %v1290 = vunpack.c.l.b16 %v1161
          %v1291 = vunpack.c.l.b16 %v1162
          %v1292 = vunpack.c.l.b16 %v1163
          %v1293 = vunpack.c.l.b16 %v1164
          %v1294 = vunpack.c.l.b16 %v1165
          %v1295 = vunpack.c.l.b16 %v1166
          %v1296 = vunpack.c.l.b16 %v1167
          %v1297 = vunpack.c.l.b16 %v1168
          %v1298 = vunpack.c.l.b16 %v1169
          %v1299 = vunpack.c.l.b16 %v1170
          %v1300 = vunpack.c.l.b16 %v1171
          %v1301 = vunpack.c.l.b16 %v1172
          %v1302 = vunpack.c.l.b16 %v1173
          %v1303 = vunpack.c.l.b16 %v1174
          %v1304 = vunpack.c.l.b16 %v1175
          %v1305 = vunpack.c.l.b16 %v1176
          %v1306 = vunpack.c.l.b16 %v1177
          %v1307 = vunpack.c.l.b16 %v1178
          %v1308 = vunpack.c.l.b16 %v1179
          %v1309 = vunpack.c.l.b16 %v1180
          %v1310 = vunpack.c.l.b16 %v1181
          %v1311 = vunpack.c.l.b16 %v1182
          %v1312 = vunpack.c.l.b16 %v1183
          %v1313 = vunpack.c.l.b16 %v1184
          %v1314 = vunpack.c.l.b16 %v1185
          %v1315 = vunpack.c.l.b16 %v1186
          %v1316 = vunpack.c.l.b16 %v1187
          %v1317 = vunpack.c.l.b16 %v1188
          %v1318 = vunpack.c.l.b16 %v1189
          %v1319 = vunpack.c.l.b16 %v1190
          %v1320 = vunpack.c.l.b16 %v1191
          %v1321 = vunpack.c.l.b16 %v1192
          %v1322 = vunpack.c.l.b16 %v1193
          %v1323 = vunpack.c.l.b16 %v1194
          %v1324 = vunpack.c.l.b16 %v1195
          %v1325 = vunpack.c.l.b16 %v1196
          %v1326 = vunpack.c.l.b16 %v1197
          %v1327 = vunpack.c.l.b16 %v1198
          %v1328 = vunpack.c.l.b16 %v1199
          %v1329 = vunpack.c.l.b16 %v1200
          %v1330 = vunpack.c.l.b16 %v1201
          %v1331 = vunpack.c.l.b16 %v1202
          %v1332 = vunpack.c.l.b16 %v1203
          %v1333 = vunpack.c.l.b16 %v1204
          %v1334 = vunpack.c.l.b16 %v1205
          %v1335 = vunpack.c.l.b16 %v1206
          %v1336 = vunpack.c.l.b16 %v1207
          %v1337 = vunpack.c.l.b16 %v1208
          %v1338 = vunpack.c.l.b16 %v1209
          %v1339 = vunpack.c.l.b16 %v1210
          %v1340 = vunpack.c.l.b16 %v1211
          %v1341 = vunpack.c.l.b16 %v1212
          %v1342 = vunpack.c.l.b16 %v1213
          %v1343 = vunpack.c.l.b16 %v1214
          %v1344 = vunpack.c.l.b16 %v1215
          %v1345 = vunpack.c.l.b16 %v1216
          %v1346 = vunpack.c.l.b16 %v1217
          %v1347 = vunpack.c.l.b16 %v1218
          %v1348 = vunpack.c.l.b16 %v1219
          %v1349 = vunpack.c.l.b16 %v1220
          %v1350 = vunpack.c.l.b16 %v1221
          %v1351 = vpack.c.b16 %v1288, %v1287
          %v1352 = vpack.c.b16 %v1290, %v1289
          %v1353 = vpack.c.b16 %v1292, %v1291
          %v1354 = vpack.c.b16 %v1294, %v1293
          %v1355 = vpack.c.b16 %v1296, %v1295
          %v1356 = vpack.c.b16 %v1298, %v1297
          %v1357 = vpack.c.b16 %v1300, %v1299
          %v1358 = vpack.c.b16 %v1302, %v1301
          %v1359 = vpack.c.b16 %v1304, %v1303
          %v1360 = vpack.c.b16 %v1306, %v1305
          %v1361 = vpack.c.b16 %v1308, %v1307
          %v1362 = vpack.c.b16 %v1310, %v1309
          %v1363 = vpack.c.b16 %v1312, %v1311
          %v1364 = vpack.c.b16 %v1314, %v1313
          %v1365 = vpack.c.b16 %v1316, %v1315
          %v1366 = vpack.c.b16 %v1318, %v1317
          %v1367 = vpack.c.b16 %v1320, %v1319
          %v1368 = vpack.c.b16 %v1322, %v1321
          %v1369 = vpack.c.b16 %v1324, %v1323
          %v1370 = vpack.c.b16 %v1326, %v1325
          %v1371 = vpack.c.b16 %v1328, %v1327
          %v1372 = vpack.c.b16 %v1330, %v1329
          %v1373 = vpack.c.b16 %v1332, %v1331
          %v1374 = vpack.c.b16 %v1334, %v1333
          %v1375 = vpack.c.b16 %v1336, %v1335
          %v1376 = vpack.c.b16 %v1338, %v1337
          %v1377 = vpack.c.b16 %v1340, %v1339
          %v1378 = vpack.c.b16 %v1342, %v1341
          %v1379 = vpack.c.b16 %v1344, %v1343
          %v1380 = vpack.c.b16 %v1346, %v1345
          %v1381 = vpack.c.b16 %v1348, %v1347
          %v1382 = vpack.c.b16 %v1350, %v1349
          %1415 = vmatprep.subr.bf16.mxu0 0
          %1416 = vmatpush1.bf16.msra.mxu0 %v1358
          %1417 = vmatprep.subr.bf16.mxu0 0
          %1418 = vmatpush1.bf16.msra.mxu0 %v1357
          %1419 = vmatprep.subr.bf16.mxu0 0
          %1420 = vmatpush1.bf16.msra.mxu0 %v1356
          %1421 = vmatprep.subr.bf16.mxu0 0
          %1422 = vmatpush1.bf16.msra.mxu0 %v1355
          %1423 = vmatprep.subr.bf16.mxu0 0
          %1424 = vmatpush1.bf16.msra.mxu0 %v1354
          %1425 = vmatprep.subr.bf16.mxu0 0
          %1426 = vmatpush1.bf16.msra.mxu0 %v1353
          %1427 = vmatprep.subr.bf16.mxu0 0
          %1428 = vmatpush1.bf16.msra.mxu0 %v1352
          %1429 = vmatprep.subr.bf16.mxu0 0
          %1430 = vmatpush1.bf16.msra.mxu0 %v1351
          %1431 = vmatprep.subr.bf16.mxu0 0
          %1432 = vmatpush2.bf16.msra.mxu0 %v1366
          %1433 = vmatprep.subr.bf16.mxu0 0
          %1434 = vmatpush2.bf16.msra.mxu0 %v1365
          %1435 = vmatprep.subr.bf16.mxu0 0
          %1436 = vmatpush2.bf16.msra.mxu0 %v1364
          %1437 = vmatprep.subr.bf16.mxu0 0
          %1438 = vmatpush2.bf16.msra.mxu0 %v1363
          %1439 = vmatprep.subr.bf16.mxu0 0
          %1440 = vmatpush2.bf16.msra.mxu0 %v1362
          %1441 = vmatprep.subr.bf16.mxu0 0
          %1442 = vmatpush2.bf16.msra.mxu0 %v1361
          %1443 = vmatprep.subr.bf16.mxu0 0
          %1444 = vmatpush2.bf16.msra.mxu0 %v1360
          %1445 = vmatprep.subr.bf16.mxu0 0
          %1446 = vmatpush2.bf16.msra.mxu0 %v1359
          %1447 = vmatprep.mubr.bf16.mxu0 %v1155
          %1448 = vmatmul.mubr.bf16.gmra.mxu0 %v1154
          %v1449 = vpop.f32.mrf.mxu0
          %v1450 = vadd.f32 %v1222, %v1449
          %v1451 = vpop.f32.mrf.mxu0
          %v1452 = vpop.f32.mrf.mxu0
          %v1453 = vpop.f32.mrf.mxu0
          %1454 = vdwg.mxu0
          %1455 = vmatprep.subr.bf16.mxu0 0
          %1456 = vmatpush1.bf16.msra.mxu0 %v1374
          %1457 = vmatprep.subr.bf16.mxu0 0
          %1458 = vmatpush1.bf16.msra.mxu0 %v1373
          %1459 = vmatprep.subr.bf16.mxu0 0
          %1460 = vmatpush1.bf16.msra.mxu0 %v1372
          %1461 = vmatprep.subr.bf16.mxu0 0
          %1462 = vmatpush1.bf16.msra.mxu0 %v1371
          %1463 = vmatprep.subr.bf16.mxu0 0
          %1464 = vmatpush1.bf16.msra.mxu0 %v1370
          %1465 = vmatprep.subr.bf16.mxu0 0
          %1466 = vmatpush1.bf16.msra.mxu0 %v1369
          %1467 = vmatprep.subr.bf16.mxu0 0
          %1468 = vmatpush1.bf16.msra.mxu0 %v1368
          %1469 = vmatprep.subr.bf16.mxu0 0
          %1470 = vmatpush1.bf16.msra.mxu0 %v1367
          %1471 = vmatprep.subr.bf16.mxu0 0
          %1472 = vmatpush2.bf16.msra.mxu0 %v1382
          %1473 = vmatprep.subr.bf16.mxu0 0
          %1474 = vmatpush2.bf16.msra.mxu0 %v1381
          %1475 = vmatprep.subr.bf16.mxu0 0
          %1476 = vmatpush2.bf16.msra.mxu0 %v1380
          %1477 = vmatprep.subr.bf16.mxu0 0
          %1478 = vmatpush2.bf16.msra.mxu0 %v1379
          %1479 = vmatprep.subr.bf16.mxu0 0
          %1480 = vmatpush2.bf16.msra.mxu0 %v1378
          %1481 = vmatprep.subr.bf16.mxu0 0
          %1482 = vmatpush2.bf16.msra.mxu0 %v1377
          %1483 = vmatprep.subr.bf16.mxu0 0
          %1484 = vmatpush2.bf16.msra.mxu0 %v1376
          %1485 = vmatprep.subr.bf16.mxu0 0
          %1486 = vmatpush2.bf16.msra.mxu0 %v1375
          %1487 = vmatprep.mubr.bf16.mxu0 %v1157
          %1488 = vmatmul.mubr.bf16.gmra.mxu0 %v1156
          %v1489 = vpop.f32.mrf.mxu0
          %v1490 = vadd.f32 %v1450, %v1489
          %v1491 = vpop.f32.mrf.mxu0
          %v1492 = vpop.f32.mrf.mxu0
          %v1493 = vpop.f32.mrf.mxu0
          %1494 = vdwg.mxu0
          %1495 = vst [vmem:[%s212] sm:$0x1] %v1490
        $region44: #{mlcnnet_forward.1} parent=35 // pred_fallthru
          _
        %s1496 = sand.u32 %s129, 1
        %s1497 = scalar_lea.sflag [#allocation4], %s1496
        %s1498 = sand.u32 %s129, 1
        %s1499 = scalar_lea.vmem [#allocation3], %s1498
        // Predicated region
        $region45: #{mlcnnet_forward.1} parent=35 // pred_check
          %p1500 = pneg %p139
        $region46: #{mlcnnet_forward.1} parent=35 // pred_check_branch
          %1502 = sbr.rel (%p1500) target = $region48
        $region47: #{mlcnnet_forward.1} parent=35 // pred_region
          %s1504 = ssub.s32 16, 16
          %1505 = vsyncadd %s1497, %s1504
          %s1506 = smul.addr %s22, 16
          %s1507 = scalar_lea.hbm %s4, %s1506
          %s1509 = sshll.u32 %s1499, 4
          %s1510 = int_to_ptr.vmem [resolvable:$true] %s1509
          %1512 = dma.vmem_to_hbm [thread:$0]  %s1510, 16, %s1507, %s1497
        $region48: #{mlcnnet_forward.1} parent=35 // pred_fallthru
          _
      $region36: #{mlcnnet_forward.1} parent=5 // pred_fallthru
        _
      %p1513 = scmp.le.s32.totalorder 2, %s13
      // Predicated region
      $region49: #{mlcnnet_forward.1} parent=5 // pred_check
        %p1514 = pneg %p1513
      $region50: #{mlcnnet_forward.1} parent=5 // pred_check_branch
        %1516 = sbr.rel (%p1514) target = $region52
      $region51: #{mlcnnet_forward.1} parent=5 // pred_region
        %s1517 = ssub.s32 %s13, 2
        // Predicated region
        $region53: #{mlcnnet_forward.1} parent=51 // pred_check
          %p1518 = pneg %p145
        $region54: #{mlcnnet_forward.1} parent=51 // pred_check_branch
          %1520 = sbr.rel (%p1518) target = $region56
        $region55: #{mlcnnet_forward.1} parent=51 // pred_region
          %s1521 = sand.u32 %s130, 1
          %s1522 = scalar_lea.sflag [#allocation4], %s1521
          %s1523 = sand.u32 %s130, 1
          %s1524 = scalar_lea.vmem [#allocation3], %s1523
          %1525 = dma.done %s1522, 16
        $region56: #{mlcnnet_forward.1} parent=51 // pred_fallthru
          _
      $region52: #{mlcnnet_forward.1} parent=5 // pred_fallthru
        _
    $region6: #{mlcnnet_forward.1} parent=1 // loop_footer
      %s17 = sadd.s32 1, %s13
    $region7: #{mlcnnet_forward.1} parent=1 // loop_footer_branch
      %12 = sbr.rel target = $region3
    $region8: #{mlcnnet_forward.1} parent=1 // loop_exit
      _
    %1526 = vsyncpa [#allocation4], 1
    %s1527 = scalar_lea.sflag [#allocation4], 1
    %1528 = vsyncpa %s1527, 1

</llo_original>
